<compile_context>
chip_gen: v5e
topology: v5e:2x2
jax: 0.10.0
libtpu: 0.0.40
codegen_flags: <defaults>
</compile_context>

<pallas_src>
import functools

import jax
import jax.numpy as jnp
from jax.experimental import pallas as pl
from jax.experimental.pallas import tpu as pltpu


def _round_up(x, m):
    return ((x + m - 1) // m) * m


# ---------------------------------------------------------------------------
# Kernel 1: query embedding (linear embedder + L2 normalize), bf16 output
# ---------------------------------------------------------------------------
def _embed_kernel(x_ref, w_ref, b_ref, o_ref):
    z = jnp.dot(x_ref[...], w_ref[...], preferred_element_type=jnp.float32)
    z = z + b_ref[...]
    inv = jax.lax.rsqrt(jnp.sum(z * z, axis=-1, keepdims=True) + 1e-12)
    o_ref[...] = (z * inv).astype(o_ref.dtype)


def embed_queries(x_flat_pad, w, b_row):
    """One-shot embedding: everything fits comfortably in VMEM at these sizes."""
    n_pad, _ = x_flat_pad.shape
    d = w.shape[1]
    # TODO(synk): K-tile the (F, D) weight matmul with an f32 accumulator if F
    # grows beyond a few thousand features.
    return pl.pallas_call(
        _embed_kernel,
        out_shape=jax.ShapeDtypeStruct((n_pad, d), jnp.bfloat16),
    )(x_flat_pad, w, b_row)


# ---------------------------------------------------------------------------
# Kernel 2: masked cosine-similarity scan over DB tiles (parallel grid)
# ---------------------------------------------------------------------------
def _masked_sim_kernel(q_ref,      # VMEM (N_pad, D)   bf16  (constant block)
                       qcat_ref,   # VMEM (N_pad, 1)   int32 (constant block)
                       dbt_ref,    # VMEM (D, tile_m)  bf16  DB tile (pre-transposed)
                       dbcat_ref,  # VMEM (1, tile_m)  int32 DB categories tile
                       o_ref):     # VMEM (N_pad, tile_m) f32 masked similarities
    sims = jnp.dot(q_ref[...], dbt_ref[...], preferred_element_type=jnp.float32)
    same_cat = qcat_ref[...] == dbcat_ref[...]      # (N_pad,1)==(1,tile_m)
    o_ref[...] = jnp.where(same_cat, sims, jnp.float32(-1e9))


def masked_similarities(q_emb_bf16, qcat_col, db_emb_t_bf16, db_cats_row, *, tile_m):
    n_pad, d = q_emb_bf16.shape
    m = db_emb_t_bf16.shape[1]
    assert m % tile_m == 0 and tile_m % 128 == 0
    return pl.pallas_call(
        _masked_sim_kernel,
        out_shape=jax.ShapeDtypeStruct((n_pad, m), jnp.float32),
        grid=(m // tile_m,),
        in_specs=[
            pl.BlockSpec((n_pad, d), lambda j: (0, 0)),    # q_emb   (constant)
            pl.BlockSpec((n_pad, 1), lambda j: (0, 0)),    # q cats  (constant)
            pl.BlockSpec((d, tile_m), lambda j: (0, j)),   # DB tile
            pl.BlockSpec((1, tile_m), lambda j: (0, j)),   # DB categories tile
        ],
        out_specs=pl.BlockSpec((n_pad, tile_m), lambda j: (0, j)),
        compiler_params=pltpu.CompilerParams(
            # No cross-step state -> DB axis is truly independent: megacore
            # shards the memory-bound DB stream across both TCs on v7x.
            dimension_semantics=("parallel",),
            vmem_limit_bytes=32 * 1024 * 1024,
        ),
    )(q_emb_bf16, qcat_col, db_emb_t_bf16, db_cats_row)


# ---------------------------------------------------------------------------
# Fused forward glue under one jit: pad -> embed -> scan -> top-k -> gather
# ---------------------------------------------------------------------------
@functools.partial(jax.jit, static_argnames=("top_k", "tile_m"))
def _retrieve(query_images, query_categories, w, b_row, db_emb_t, db_cats_row,
              db_cats, *, top_k, tile_m):
    n = query_images.shape[0]
    f = w.shape[0]
    # Pad the query batch to a full sublane tile (8): unmasked stores, no
    # wasted vreg rows.  Padded rows (category -1) never match any DB column.
    n_pad = _round_up(max(n, 8), 8)

    x_flat = query_images.reshape(n, f).astype(jnp.float32)
    x_pad = jnp.zeros((n_pad, f), jnp.float32).at[:n].set(x_flat)
    qcat_col = jnp.full((n_pad, 1), -1, jnp.int32).at[:n, 0].set(
        query_categories.astype(jnp.int32))

    q_emb = embed_queries(x_pad, w, b_row)
    sims_pad = masked_similarities(q_emb, qcat_col, db_emb_t, db_cats_row,
                                   tile_m=tile_m)
    sims = sims_pad[:n]
    # TODO(synk): for very large databases, reduce each DB tile to a partial
    # top-k inside the kernel so the DB read is the only HBM pass.
    top_sims, top_idx = jax.lax.top_k(sims, top_k)
    result_cats = db_cats[top_idx]
    return top_sims, top_idx, result_cats


# ---------------------------------------------------------------------------
# ImageRetrieval equivalent
# ---------------------------------------------------------------------------
class ImageRetrievalPallas:
    """JAX/Pallas analogue of ImageRetrieval.

    `model`    -> deterministic linear embedder (embed_w, embed_b)
    `database` -> in-memory normalized embedding matrix + category labels
    """

    def __init__(self, embed_w, embed_b, db_embeddings, db_categories,
                 top_k=8, tile_m=512):
        # analogue of database.get_pgvector_info(): build the "vector index"
        # once at setup (normalize + transpose + bf16 cast + pad), so each
        # forward() streams the (D, M) bf16 database once, lane-dense along M.
        assert tile_m % 128 == 0
        db = db_embeddings.astype(jnp.float32)
        norm = jnp.sqrt(jnp.sum(db * db, axis=-1, keepdims=True)) + 1e-12
        db_norm = db / norm
        m, d = db_norm.shape
        m_pad = _round_up(m, tile_m)
        db_t = jnp.zeros((d, m_pad), jnp.float32).at[:, :m].set(db_norm.T)
        cats = jnp.full((m_pad,), -2, jnp.int32).at[:m].set(
            db_categories.astype(jnp.int32))      # padded cols never match
        self.db_emb_t = db_t.astype(jnp.bfloat16)          # (D, M_pad)
        self.db_cats = cats                                 # (M_pad,)
        self.db_cats_row = cats.reshape(1, m_pad)           # (1, M_pad)
        self.w = embed_w.astype(jnp.float32)                # (F, D)
        self.b_row = embed_b.reshape(1, -1).astype(jnp.float32)
        self.top_k = top_k
        self.tile_m = tile_m
        self.model_name = "pallas_linear_embedder"

    def forward(self, query_images, query_ids, query_categories):
        # fused: self._model(query_images) + database.search_similar_vectors(...)
        top_sims, top_idx, result_cats = _retrieve(
            query_images, query_categories, self.w, self.b_row,
            self.db_emb_t, self.db_cats_row, self.db_cats,
            top_k=self.top_k, tile_m=self.tile_m)
        # TODO(synk): filesystem side effects (shutil.rmtree / os.makedirs /
        # PIL image copies) have no Pallas equivalent and are omitted.
        return {
            "result_ids": top_idx,
            "result_local_paths": [],
            "result_categories": result_cats,
            "similarities": top_sims,
        }


if __name__ == "__main__":
    key = jax.random.PRNGKey(0)
    k1, k2, k3, k4, k5 = jax.random.split(key, 5)

    N, C, H, W = 2, 4, 16, 16     # query batch, NCHW like PyTorch
    F = C * H * W                 # flattened feature size = 1024
    D = 64                        # embedding dim
    M = 1024                      # database size
    NUM_CATS = 4
    TILE_M = 512                  # lane-dense DB tile; M // TILE_M = 2 grid steps

    x = jax.random.normal(k1, (N, C, H, W), dtype=jnp.float32)
    embed_w = jax.random.normal(k2, (F, D), dtype=jnp.float32) * 0.02
    embed_b = jax.random.normal(k3, (D,), dtype=jnp.float32) * 0.01
    db_embeddings = jax.random.normal(k4, (M, D), dtype=jnp.float32)
    db_categories = jax.random.randint(k5, (M,), 0, NUM_CATS, dtype=jnp.int32)

    query_ids = jnp.arange(N, dtype=jnp.int32)
    query_categories = jnp.array([0, 2], dtype=jnp.int32)

    retrieval = ImageRetrievalPallas(embed_w, embed_b, db_embeddings,
                                     db_categories, top_k=8, tile_m=TILE_M)
    out = retrieval.forward(x, query_ids, query_categories)
    jax.block_until_ready(out)
    print("KERNEL_OK")
</pallas_src>

<mosaic_0001>
module attributes {stable_mosaic.version = 11 : i64} {
  func.func @_embed_kernel(%arg0: memref<8x1024xf32, #tpu.memory_space<vmem>>, %arg1: memref<1024x64xf32, #tpu.memory_space<vmem>>, %arg2: memref<1x64xf32, #tpu.memory_space<vmem>>, %arg3: memref<8x64xbf16, #tpu.memory_space<vmem>>) attributes {dimension_semantics = [], scalar_prefetch = 0 : i64, scratch_operands = 0 : i64, tpu.core_type = #tpu.core_type<tc>} {
    %c0 = arith.constant 0 : index
    %c0_0 = arith.constant 0 : index
    %0 = vector.load %arg0[%c0, %c0_0] : memref<8x1024xf32, #tpu.memory_space<vmem>>, vector<8x1024xf32>
    %c0_1 = arith.constant 0 : index
    %c0_2 = arith.constant 0 : index
    %1 = vector.load %arg1[%c0_1, %c0_2] : memref<1024x64xf32, #tpu.memory_space<vmem>>, vector<1024x64xf32>
    %cst = arith.constant dense<0.000000e+00> : vector<8x64xf32>
    %2 = tpu.matmul %0, %1, %cst {dimension_numbers = #tpu.dot_dimension_numbers<[1], [0], [0], [1], [0, 0, 1, 1], [], []>} : vector<8x1024xf32>, vector<1024x64xf32>, vector<8x64xf32> -> vector<8x64xf32>
    %c0_3 = arith.constant 0 : index
    %c0_4 = arith.constant 0 : index
    %3 = vector.load %arg2[%c0_3, %c0_4] : memref<1x64xf32, #tpu.memory_space<vmem>>, vector<1x64xf32>
    %4 = vector.broadcast %3 : vector<1x64xf32> to vector<8x64xf32>
    %5 = arith.addf %2, %4 : vector<8x64xf32>
    %6 = arith.mulf %5, %5 : vector<8x64xf32>
    %cst_5 = arith.constant dense<0.000000e+00> : vector<8xf32>
    %7 = vector.multi_reduction <add>, %6, %cst_5 [1] : vector<8x64xf32> to vector<8xf32>
    %8 = vector.shape_cast %7 : vector<8xf32> to vector<8x1xf32>
    %cst_6 = arith.constant 9.99999996E-13 : f32
    %9 = vector.broadcast %cst_6 : f32 to vector<8x1xf32>
    %10 = arith.addf %8, %9 : vector<8x1xf32>
    %11 = math.rsqrt %10 : vector<8x1xf32>
    %12 = vector.broadcast %11 : vector<8x1xf32> to vector<8x64xf32>
    %13 = arith.mulf %5, %12 : vector<8x64xf32>
    %14 = arith.truncf %13 : vector<8x64xf32> to vector<8x64xbf16>
    %c0_7 = arith.constant 0 : index
    %c0_8 = arith.constant 0 : index
    %15 = vector.load %arg3[%c0_7, %c0_8] : memref<8x64xbf16, #tpu.memory_space<vmem>>, vector<8x64xbf16>
    tpu.vector_store %arg3[%c0_7, %c0_8], %14 {strides = array<i32>} : memref<8x64xbf16, #tpu.memory_space<vmem>>, vector<8x64xbf16>,
    return
  }
}

module attributes {stable_mosaic.version = 11 : i64} {
  func.func @_masked_sim_kernel(%arg0: i32, %arg1: memref<8x64xbf16, #tpu.memory_space<vmem>>, %arg2: memref<8x1xi32, #tpu.memory_space<vmem>>, %arg3: memref<64x512xbf16, #tpu.memory_space<vmem>>, %arg4: memref<1x512xi32, #tpu.memory_space<vmem>>, %arg5: memref<8x512xf32, #tpu.memory_space<vmem>>) attributes {dimension_semantics = [#tpu.dimension_semantics<parallel>], iteration_bounds = array<i64: 2>, scalar_prefetch = 0 : i64, scratch_operands = 0 : i64, tpu.core_type = #tpu.core_type<tc>, window_params = [{pipeline_mode = #tpu.pipeline_mode<synchronous>, transform_indices = @transform_0, window_bounds = array<i64: 8, 64>}, {pipeline_mode = #tpu.pipeline_mode<synchronous>, transform_indices = @transform_1, window_bounds = array<i64: 8, 1>}, {transform_indices = @transform_2, window_bounds = array<i64: 64, 512>}, {transform_indices = @transform_3, window_bounds = array<i64: 1, 512>}, {transform_indices = @transform_4, window_bounds = array<i64: 8, 512>}]} {
    %c0 = arith.constant 0 : index
    %c0_0 = arith.constant 0 : index
    %0 = vector.load %arg1[%c0, %c0_0] : memref<8x64xbf16, #tpu.memory_space<vmem>>, vector<8x64xbf16>
    %c0_1 = arith.constant 0 : index
    %c0_2 = arith.constant 0 : index
    %1 = vector.load %arg3[%c0_1, %c0_2] : memref<64x512xbf16, #tpu.memory_space<vmem>>, vector<64x512xbf16>
    %cst = arith.constant dense<0.000000e+00> : vector<8x512xf32>
    %2 = tpu.matmul %0, %1, %cst {dimension_numbers = #tpu.dot_dimension_numbers<[1], [0], [0], [1], [0, 0, 1, 1], [], []>} : vector<8x64xbf16>, vector<64x512xbf16>, vector<8x512xf32> -> vector<8x512xf32>
    %c0_3 = arith.constant 0 : index
    %c0_4 = arith.constant 0 : index
    %3 = vector.load %arg2[%c0_3, %c0_4] : memref<8x1xi32, #tpu.memory_space<vmem>>, vector<8x1xi32>
    %c0_5 = arith.constant 0 : index
    %c0_6 = arith.constant 0 : index
    %4 = vector.load %arg4[%c0_5, %c0_6] : memref<1x512xi32, #tpu.memory_space<vmem>>, vector<1x512xi32>
    %5 = vector.broadcast %3 : vector<8x1xi32> to vector<8x512xi32>
    %6 = vector.broadcast %4 : vector<1x512xi32> to vector<8x512xi32>
    %7 = arith.cmpi eq, %5, %6 : vector<8x512xi32>
    %cst_7 = arith.constant -1.000000e+09 : f32
    %8 = vector.broadcast %cst_7 : f32 to vector<8x512xf32>
    %9 = arith.select %7, %2, %8 : vector<8x512xi1>, vector<8x512xf32>
    %c0_8 = arith.constant 0 : index
    %c0_9 = arith.constant 0 : index
    %10 = vector.load %arg5[%c0_8, %c0_9] : memref<8x512xf32, #tpu.memory_space<vmem>>, vector<8x512xf32>
    tpu.vector_store %arg5[%c0_8, %c0_9], %9 {strides = array<i32>} : memref<8x512xf32, #tpu.memory_space<vmem>>, vector<8x512xf32>,
    return
  }
  func.func @transform_0(%arg0: i32) -> (i32, i32) {
    %c0_i32 = arith.constant 0 : i32
    %c0_i32_0 = arith.constant 0 : i32
    %c0_i32_1 = arith.constant 0 : i32
    return %c0_i32, %c0_i32_0 : i32, i32
  }
  func.func @transform_1(%arg0: i32) -> (i32, i32) {
    %c0_i32 = arith.constant 0 : i32
    %c0_i32_0 = arith.constant 0 : i32
    %c0_i32_1 = arith.constant 0 : i32
    return %c0_i32, %c0_i32_0 : i32, i32
  }
  func.func @transform_2(%arg0: i32) -> (i32, i32) {
    %c0_i32 = arith.constant 0 : i32
    %c0_i32_0 = arith.constant 0 : i32
    return %c0_i32, %arg0 : i32, i32
  }
  func.func @transform_3(%arg0: i32) -> (i32, i32) {
    %c0_i32 = arith.constant 0 : i32
    %c0_i32_0 = arith.constant 0 : i32
    return %c0_i32, %arg0 : i32, i32
  }
  func.func @transform_4(%arg0: i32) -> (i32, i32) {
    %c0_i32 = arith.constant 0 : i32
    %c0_i32_0 = arith.constant 0 : i32
    return %c0_i32, %arg0 : i32, i32
  }
}

</mosaic_0001>

<llo_original>
// kernel: _retrieve.2
$region0: #{_retrieve.2}
  #allocation0 [shape = 'u32[]', space=smem, size = 0x4, offset = 0x4, fixed_abs, tag = 'smem constant byte address 0x4 - core index']
  #allocation1 [shape = 'u32[72,128]{1,0:T(1,128)}', space=vmem, size = 0x9000, scoped, tag = 'internal scratch']
  %s0 = inlined_call_operand.vmem [shape: f32[8,1024], index: 0, kind: input, shape index: {}]
  %s1 = inlined_call_operand.vmem [shape: f32[1024,64], index: 1, kind: input, shape index: {}]
  %s2 = inlined_call_operand.vmem [shape: f32[1,64], index: 2, kind: input, shape index: {}]
  %s3 = inlined_call_operand.vmem [shape: bf16[8,64], index: 3, kind: output, shape index: {}]
  %s4 = sld [smem:[#allocation0]]
  $region22: #{_retrieve.2} parent=0
    _
  %s6 = ssub.s32 1, %s4
  %s7 = scalar_select 0, %s6, %s4
  // Predicated region
  $region2: #{_retrieve.2} parent=0 // pred_check
    _
  $region3: #{_retrieve.2} parent=0 // pred_check_branch
    %9 = sbr.rel (0) target = $region5
  $region4: #{_retrieve.2} parent=0 // pred_region
    _
  $region5: #{_retrieve.2} parent=0 // pred_fallthru
    _
  // Predicated region
  $region6: #{_retrieve.2} parent=0 // pred_check
    _
  $region7: #{_retrieve.2} parent=0 // pred_check_branch
    %11 = sbr.rel (0) target = $region9
  $region8: #{_retrieve.2} parent=0 // pred_region
    _
  $region9: #{_retrieve.2} parent=0 // pred_fallthru
    _
  // Predicated region
  $region10: #{_retrieve.2} parent=0 // pred_check
    _
  $region11: #{_retrieve.2} parent=0 // pred_check_branch
    %13 = sbr.rel (0) target = $region13
  $region12: #{_retrieve.2} parent=0 // pred_region
    _
  $region13: #{_retrieve.2} parent=0 // pred_fallthru
    _
  %v14 = vld [vmem:[%s0] sm:$0xff]
  %v15 = vld [vmem:[%s0 + $0x8] sm:$0xff]
  %v16 = vld [vmem:[%s0 + $0x10] sm:$0xff]
  %v17 = vld [vmem:[%s0 + $0x18] sm:$0xff]
  %v18 = vld [vmem:[%s0 + $0x20] sm:$0xff]
  %v19 = vld [vmem:[%s0 + $0x28] sm:$0xff]
  %v20 = vld [vmem:[%s0 + $0x30] sm:$0xff]
  %v21 = vld [vmem:[%s0 + $0x38] sm:$0xff]
  %v22 = vld [vmem:[%s1] sm:$0xff]
  %v23 = vld [vmem:[%s1 + $0x8] sm:$0xff]
  %v24 = vld [vmem:[%s1 + $0x10] sm:$0xff]
  %v25 = vld [vmem:[%s1 + $0x18] sm:$0xff]
  %v26 = vld [vmem:[%s1 + $0x20] sm:$0xff]
  %v27 = vld [vmem:[%s1 + $0x28] sm:$0xff]
  %v28 = vld [vmem:[%s1 + $0x30] sm:$0xff]
  %v29 = vld [vmem:[%s1 + $0x38] sm:$0xff]
  %v30 = vld [vmem:[%s1 + $0x40] sm:$0xff]
  %v31 = vld [vmem:[%s1 + $0x48] sm:$0xff]
  %v32 = vld [vmem:[%s1 + $0x50] sm:$0xff]
  %v33 = vld [vmem:[%s1 + $0x58] sm:$0xff]
  %v34 = vld [vmem:[%s1 + $0x60] sm:$0xff]
  %v35 = vld [vmem:[%s1 + $0x68] sm:$0xff]
  %v36 = vld [vmem:[%s1 + $0x70] sm:$0xff]
  %v37 = vld [vmem:[%s1 + $0x78] sm:$0xff]
  %v38 = vld [vmem:[%s1 + $0x80] sm:$0xff]
  %v39 = vld [vmem:[%s1 + $0x88] sm:$0xff]
  %v40 = vld [vmem:[%s1 + $0x90] sm:$0xff]
  %v41 = vld [vmem:[%s1 + $0x98] sm:$0xff]
  %v42 = vld [vmem:[%s1 + $0xa0] sm:$0xff]
  %v43 = vld [vmem:[%s1 + $0xa8] sm:$0xff]
  %v44 = vld [vmem:[%s1 + $0xb0] sm:$0xff]
  %v45 = vld [vmem:[%s1 + $0xb8] sm:$0xff]
  %v46 = vld [vmem:[%s1 + $0xc0] sm:$0xff]
  %v47 = vld [vmem:[%s1 + $0xc8] sm:$0xff]
  %v48 = vld [vmem:[%s1 + $0xd0] sm:$0xff]
  %v49 = vld [vmem:[%s1 + $0xd8] sm:$0xff]
  %v50 = vld [vmem:[%s1 + $0xe0] sm:$0xff]
  %v51 = vld [vmem:[%s1 + $0xe8] sm:$0xff]
  %v52 = vld [vmem:[%s1 + $0xf0] sm:$0xff]
  %v53 = vld [vmem:[%s1 + $0xf8] sm:$0xff]
  %v54 = vld [vmem:[%s1 + $0x100] sm:$0xff]
  %v55 = vld [vmem:[%s1 + $0x108] sm:$0xff]
  %v56 = vld [vmem:[%s1 + $0x110] sm:$0xff]
  %v57 = vld [vmem:[%s1 + $0x118] sm:$0xff]
  %v58 = vld [vmem:[%s1 + $0x120] sm:$0xff]
  %v59 = vld [vmem:[%s1 + $0x128] sm:$0xff]
  %v60 = vld [vmem:[%s1 + $0x130] sm:$0xff]
  %v61 = vld [vmem:[%s1 + $0x138] sm:$0xff]
  %v62 = vld [vmem:[%s1 + $0x140] sm:$0xff]
  %v63 = vld [vmem:[%s1 + $0x148] sm:$0xff]
  %v64 = vld [vmem:[%s1 + $0x150] sm:$0xff]
  %v65 = vld [vmem:[%s1 + $0x158] sm:$0xff]
  %v66 = vld [vmem:[%s1 + $0x160] sm:$0xff]
  %v67 = vld [vmem:[%s1 + $0x168] sm:$0xff]
  %v68 = vld [vmem:[%s1 + $0x170] sm:$0xff]
  %v69 = vld [vmem:[%s1 + $0x178] sm:$0xff]
  %v70 = vld [vmem:[%s1 + $0x180] sm:$0xff]
  %v71 = vld [vmem:[%s1 + $0x188] sm:$0xff]
  %v72 = vld [vmem:[%s1 + $0x190] sm:$0xff]
  %v73 = vld [vmem:[%s1 + $0x198] sm:$0xff]
  %v74 = vld [vmem:[%s1 + $0x1a0] sm:$0xff]
  %v75 = vld [vmem:[%s1 + $0x1a8] sm:$0xff]
  %v76 = vld [vmem:[%s1 + $0x1b0] sm:$0xff]
  %v77 = vld [vmem:[%s1 + $0x1b8] sm:$0xff]
  %v78 = vld [vmem:[%s1 + $0x1c0] sm:$0xff]
  %v79 = vld [vmem:[%s1 + $0x1c8] sm:$0xff]
  %v80 = vld [vmem:[%s1 + $0x1d0] sm:$0xff]
  %v81 = vld [vmem:[%s1 + $0x1d8] sm:$0xff]
  %v82 = vld [vmem:[%s1 + $0x1e0] sm:$0xff]
  %v83 = vld [vmem:[%s1 + $0x1e8] sm:$0xff]
  %v84 = vld [vmem:[%s1 + $0x1f0] sm:$0xff]
  %v85 = vld [vmem:[%s1 + $0x1f8] sm:$0xff]
  %v86 = vld [vmem:[%s1 + $0x200] sm:$0xff]
  %v87 = vld [vmem:[%s1 + $0x208] sm:$0xff]
  %v88 = vld [vmem:[%s1 + $0x210] sm:$0xff]
  %v89 = vld [vmem:[%s1 + $0x218] sm:$0xff]
  %v90 = vld [vmem:[%s1 + $0x220] sm:$0xff]
  %v91 = vld [vmem:[%s1 + $0x228] sm:$0xff]
  %v92 = vld [vmem:[%s1 + $0x230] sm:$0xff]
  %v93 = vld [vmem:[%s1 + $0x238] sm:$0xff]
  %v94 = vld [vmem:[%s1 + $0x240] sm:$0xff]
  %v95 = vld [vmem:[%s1 + $0x248] sm:$0xff]
  %v96 = vld [vmem:[%s1 + $0x250] sm:$0xff]
  %v97 = vld [vmem:[%s1 + $0x258] sm:$0xff]
  %v98 = vld [vmem:[%s1 + $0x260] sm:$0xff]
  %v99 = vld [vmem:[%s1 + $0x268] sm:$0xff]
  %v100 = vld [vmem:[%s1 + $0x270] sm:$0xff]
  %v101 = vld [vmem:[%s1 + $0x278] sm:$0xff]
  %v102 = vld [vmem:[%s1 + $0x280] sm:$0xff]
  %v103 = vld [vmem:[%s1 + $0x288] sm:$0xff]
  %v104 = vld [vmem:[%s1 + $0x290] sm:$0xff]
  %v105 = vld [vmem:[%s1 + $0x298] sm:$0xff]
  %v106 = vld [vmem:[%s1 + $0x2a0] sm:$0xff]
  %v107 = vld [vmem:[%s1 + $0x2a8] sm:$0xff]
  %v108 = vld [vmem:[%s1 + $0x2b0] sm:$0xff]
  %v109 = vld [vmem:[%s1 + $0x2b8] sm:$0xff]
  %v110 = vld [vmem:[%s1 + $0x2c0] sm:$0xff]
  %v111 = vld [vmem:[%s1 + $0x2c8] sm:$0xff]
  %v112 = vld [vmem:[%s1 + $0x2d0] sm:$0xff]
  %v113 = vld [vmem:[%s1 + $0x2d8] sm:$0xff]
  %v114 = vld [vmem:[%s1 + $0x2e0] sm:$0xff]
  %v115 = vld [vmem:[%s1 + $0x2e8] sm:$0xff]
  %v116 = vld [vmem:[%s1 + $0x2f0] sm:$0xff]
  %v117 = vld [vmem:[%s1 + $0x2f8] sm:$0xff]
  %v118 = vld [vmem:[%s1 + $0x300] sm:$0xff]
  %v119 = vld [vmem:[%s1 + $0x308] sm:$0xff]
  %v120 = vld [vmem:[%s1 + $0x310] sm:$0xff]
  %v121 = vld [vmem:[%s1 + $0x318] sm:$0xff]
  %v122 = vld [vmem:[%s1 + $0x320] sm:$0xff]
  %v123 = vld [vmem:[%s1 + $0x328] sm:$0xff]
  %v124 = vld [vmem:[%s1 + $0x330] sm:$0xff]
  %v125 = vld [vmem:[%s1 + $0x338] sm:$0xff]
  %v126 = vld [vmem:[%s1 + $0x340] sm:$0xff]
  %v127 = vld [vmem:[%s1 + $0x348] sm:$0xff]
  %v128 = vld [vmem:[%s1 + $0x350] sm:$0xff]
  %v129 = vld [vmem:[%s1 + $0x358] sm:$0xff]
  %v130 = vld [vmem:[%s1 + $0x360] sm:$0xff]
  %v131 = vld [vmem:[%s1 + $0x368] sm:$0xff]
  %v132 = vld [vmem:[%s1 + $0x370] sm:$0xff]
  %v133 = vld [vmem:[%s1 + $0x378] sm:$0xff]
  %v134 = vld [vmem:[%s1 + $0x380] sm:$0xff]
  %v135 = vld [vmem:[%s1 + $0x388] sm:$0xff]
  %v136 = vld [vmem:[%s1 + $0x390] sm:$0xff]
  %v137 = vld [vmem:[%s1 + $0x398] sm:$0xff]
  %v138 = vld [vmem:[%s1 + $0x3a0] sm:$0xff]
  %v139 = vld [vmem:[%s1 + $0x3a8] sm:$0xff]
  %v140 = vld [vmem:[%s1 + $0x3b0] sm:$0xff]
  %v141 = vld [vmem:[%s1 + $0x3b8] sm:$0xff]
  %v142 = vld [vmem:[%s1 + $0x3c0] sm:$0xff]
  %v143 = vld [vmem:[%s1 + $0x3c8] sm:$0xff]
  %v144 = vld [vmem:[%s1 + $0x3d0] sm:$0xff]
  %v145 = vld [vmem:[%s1 + $0x3d8] sm:$0xff]
  %v146 = vld [vmem:[%s1 + $0x3e0] sm:$0xff]
  %v147 = vld [vmem:[%s1 + $0x3e8] sm:$0xff]
  %v148 = vld [vmem:[%s1 + $0x3f0] sm:$0xff]
  %v149 = vld [vmem:[%s1 + $0x3f8] sm:$0xff]
  %v150 = vld [vmem:[%s2] sm:$0x1]
  %v152 = vperm.slane %v150, 0
  %154 = vmatpush.msra.mxu0 %v37
  %155 = vmatpush.msra.mxu0 %v36
  %156 = vmatpush.msra.mxu0 %v35
  %157 = vmatpush.msra.mxu0 %v34
  %158 = vmatpush.msra.mxu0 %v33
  %159 = vmatpush.msra.mxu0 %v32
  %160 = vmatpush.msra.mxu0 %v31
  %161 = vmatpush.msra.mxu0 %v30
  %162 = vmatpush.msra.mxu0 %v29
  %163 = vmatpush.msra.mxu0 %v28
  %164 = vmatpush.msra.mxu0 %v27
  %165 = vmatpush.msra.mxu0 %v26
  %166 = vmatpush.msra.mxu0 %v25
  %167 = vmatpush.msra.mxu0 %v24
  %168 = vmatpush.msra.mxu0 %v23
  %169 = vmatpush.msra.mxu0 %v22
  %170 = vmatmul.f32.gmra.mxu0 %v14
  %v171 = vpop.f32.mrf.mxu0
  %v172 = vadd.f32 %v152, %v171
  %173 = vdwg.mxu0
  %174 = vmatpush.msra.mxu0 %v53
  %175 = vmatpush.msra.mxu0 %v52
  %176 = vmatpush.msra.mxu0 %v51
  %177 = vmatpush.msra.mxu0 %v50
  %178 = vmatpush.msra.mxu0 %v49
  %179 = vmatpush.msra.mxu0 %v48
  %180 = vmatpush.msra.mxu0 %v47
  %181 = vmatpush.msra.mxu0 %v46
  %182 = vmatpush.msra.mxu0 %v45
  %183 = vmatpush.msra.mxu0 %v44
  %184 = vmatpush.msra.mxu0 %v43
  %185 = vmatpush.msra.mxu0 %v42
  %186 = vmatpush.msra.mxu0 %v41
  %187 = vmatpush.msra.mxu0 %v40
  %188 = vmatpush.msra.mxu0 %v39
  %189 = vmatpush.msra.mxu0 %v38
  %190 = vmatmul.f32.gmra.mxu0 %v15
  %v191 = vpop.f32.mrf.mxu0
  %v192 = vadd.f32 %v172, %v191
  %193 = vdwg.mxu0
  %194 = vmatpush.msra.mxu0 %v69
  %195 = vmatpush.msra.mxu0 %v68
  %196 = vmatpush.msra.mxu0 %v67
  %197 = vmatpush.msra.mxu0 %v66
  %198 = vmatpush.msra.mxu0 %v65
  %199 = vmatpush.msra.mxu0 %v64
  %200 = vmatpush.msra.mxu0 %v63
  %201 = vmatpush.msra.mxu0 %v62
  %202 = vmatpush.msra.mxu0 %v61
  %203 = vmatpush.msra.mxu0 %v60
  %204 = vmatpush.msra.mxu0 %v59
  %205 = vmatpush.msra.mxu0 %v58
  %206 = vmatpush.msra.mxu0 %v57
  %207 = vmatpush.msra.mxu0 %v56
  %208 = vmatpush.msra.mxu0 %v55
  %209 = vmatpush.msra.mxu0 %v54
  %210 = vmatmul.f32.gmra.mxu0 %v16
  %v211 = vpop.f32.mrf.mxu0
  %v212 = vadd.f32 %v192, %v211
  %213 = vdwg.mxu0
  %214 = vmatpush.msra.mxu0 %v85
  %215 = vmatpush.msra.mxu0 %v84
  %216 = vmatpush.msra.mxu0 %v83
  %217 = vmatpush.msra.mxu0 %v82
  %218 = vmatpush.msra.mxu0 %v81
  %219 = vmatpush.msra.mxu0 %v80
  %220 = vmatpush.msra.mxu0 %v79
  %221 = vmatpush.msra.mxu0 %v78
  %222 = vmatpush.msra.mxu0 %v77
  %223 = vmatpush.msra.mxu0 %v76
  %224 = vmatpush.msra.mxu0 %v75
  %225 = vmatpush.msra.mxu0 %v74
  %226 = vmatpush.msra.mxu0 %v73
  %227 = vmatpush.msra.mxu0 %v72
  %228 = vmatpush.msra.mxu0 %v71
  %229 = vmatpush.msra.mxu0 %v70
  %230 = vmatmul.f32.gmra.mxu0 %v17
  %v231 = vpop.f32.mrf.mxu0
  %v232 = vadd.f32 %v212, %v231
  %233 = vdwg.mxu0
  %234 = vmatpush.msra.mxu0 %v101
  %235 = vmatpush.msra.mxu0 %v100
  %236 = vmatpush.msra.mxu0 %v99
  %237 = vmatpush.msra.mxu0 %v98
  %238 = vmatpush.msra.mxu0 %v97
  %239 = vmatpush.msra.mxu0 %v96
  %240 = vmatpush.msra.mxu0 %v95
  %241 = vmatpush.msra.mxu0 %v94
  %242 = vmatpush.msra.mxu0 %v93
  %243 = vmatpush.msra.mxu0 %v92
  %244 = vmatpush.msra.mxu0 %v91
  %245 = vmatpush.msra.mxu0 %v90
  %246 = vmatpush.msra.mxu0 %v89
  %247 = vmatpush.msra.mxu0 %v88
  %248 = vmatpush.msra.mxu0 %v87
  %249 = vmatpush.msra.mxu0 %v86
  %250 = vmatmul.f32.gmra.mxu0 %v18
  %v251 = vpop.f32.mrf.mxu0
  %v252 = vadd.f32 %v232, %v251
  %253 = vdwg.mxu0
  %254 = vmatpush.msra.mxu0 %v117
  %255 = vmatpush.msra.mxu0 %v116
  %256 = vmatpush.msra.mxu0 %v115
  %257 = vmatpush.msra.mxu0 %v114
  %258 = vmatpush.msra.mxu0 %v113
  %259 = vmatpush.msra.mxu0 %v112
  %260 = vmatpush.msra.mxu0 %v111
  %261 = vmatpush.msra.mxu0 %v110
  %262 = vmatpush.msra.mxu0 %v109
  %263 = vmatpush.msra.mxu0 %v108
  %264 = vmatpush.msra.mxu0 %v107
  %265 = vmatpush.msra.mxu0 %v106
  %266 = vmatpush.msra.mxu0 %v105
  %267 = vmatpush.msra.mxu0 %v104
  %268 = vmatpush.msra.mxu0 %v103
  %269 = vmatpush.msra.mxu0 %v102
  %270 = vmatmul.f32.gmra.mxu0 %v19
  %v271 = vpop.f32.mrf.mxu0
  %v272 = vadd.f32 %v252, %v271
  %273 = vdwg.mxu0
  %274 = vmatpush.msra.mxu0 %v133
  %275 = vmatpush.msra.mxu0 %v132
  %276 = vmatpush.msra.mxu0 %v131
  %277 = vmatpush.msra.mxu0 %v130
  %278 = vmatpush.msra.mxu0 %v129
  %279 = vmatpush.msra.mxu0 %v128
  %280 = vmatpush.msra.mxu0 %v127
  %281 = vmatpush.msra.mxu0 %v126
  %282 = vmatpush.msra.mxu0 %v125
  %283 = vmatpush.msra.mxu0 %v124
  %284 = vmatpush.msra.mxu0 %v123
  %285 = vmatpush.msra.mxu0 %v122
  %286 = vmatpush.msra.mxu0 %v121
  %287 = vmatpush.msra.mxu0 %v120
  %288 = vmatpush.msra.mxu0 %v119
  %289 = vmatpush.msra.mxu0 %v118
  %290 = vmatmul.f32.gmra.mxu0 %v20
  %v291 = vpop.f32.mrf.mxu0
  %v292 = vadd.f32 %v272, %v291
  %293 = vdwg.mxu0
  %294 = vmatpush.msra.mxu0 %v149
  %295 = vmatpush.msra.mxu0 %v148
  %296 = vmatpush.msra.mxu0 %v147
  %297 = vmatpush.msra.mxu0 %v146
  %298 = vmatpush.msra.mxu0 %v145
  %299 = vmatpush.msra.mxu0 %v144
  %300 = vmatpush.msra.mxu0 %v143
  %301 = vmatpush.msra.mxu0 %v142
  %302 = vmatpush.msra.mxu0 %v141
  %303 = vmatpush.msra.mxu0 %v140
  %304 = vmatpush.msra.mxu0 %v139
  %305 = vmatpush.msra.mxu0 %v138
  %306 = vmatpush.msra.mxu0 %v137
  %307 = vmatpush.msra.mxu0 %v136
  %308 = vmatpush.msra.mxu0 %v135
  %309 = vmatpush.msra.mxu0 %v134
  %310 = vmatmul.f32.gmra.mxu0 %v21
  %v311 = vpop.f32.mrf.mxu0
  %v312 = vadd.f32 %v292, %v311
  %313 = vdwg.mxu0
  %v314 = vmul.f32 %v312, %v312
  %vm315 = vcmask 523264
  %v316 = vsel %vm315, %v314, 0.0
  %317 = vadd.xlane.f32.xlu0 %v316
  %v318 = vpop.xlane.xlu0 %317
  %v319 = vadd.f32 %v318, 1e-12
  %v320 = vrsqrt.pop %v319
  %v321 = vmul.f32 %v320, %v319
  %v322 = vmul.f32 %v321, %v320
  %v323 = vmul.f32 0.5, %v322
  %v324 = vsub.f32 1.5, %v323
  %v325 = vmul.f32 %v320, %v324
  %vm326 = vweird.f32 %v319
  %vm327 = vweird.f32 %v320
  %vm328 = vmor %vm326, %vm327
  %v329 = vsel %vm328, %v320, %v325
  %v330 = vmul.f32 %v312, %v329
  %v331 = vpack.c.bf16 %v330, %v330
  %vm332 = vcmask 519168
  %333 = vst.msk [vmem:[%s3] sm:$0xf] %vm332, %v331
  // Predicated region
  $region14: #{_retrieve.2} parent=0 // pred_check
    _
  $region15: #{_retrieve.2} parent=0 // pred_check_branch
    %335 = sbr.rel (0) target = $region17
  $region16: #{_retrieve.2} parent=0 // pred_region
    _
  $region17: #{_retrieve.2} parent=0 // pred_fallthru
    _
  // Predicated region
  $region18: #{_retrieve.2} parent=0 // pred_check
    _
  $region19: #{_retrieve.2} parent=0 // pred_check_branch
    %337 = sbr.rel (0) target = $region21
  $region20: #{_retrieve.2} parent=0 // pred_region
    _
  $region21: #{_retrieve.2} parent=0 // pred_fallthru
    _

// kernel: _retrieve.3
$region0: #{_retrieve.3}
  #allocation0 [shape = 'u32[]', space=smem, size = 0x4, offset = 0x4, fixed_abs, tag = 'smem constant byte address 0x4 - core index']
  #allocation1 [shape = 'u32[72,128]{1,0:T(1,128)}', space=vmem, size = 0x9000, scoped, tag = 'internal scratch']
  %s0 = inlined_call_operand.vmem [shape: bf16[8,64], index: 0, kind: input, shape index: {}]
  %s1 = inlined_call_operand.vmem [shape: s32[8,1], index: 1, kind: input, shape index: {}]
  %s2 = inlined_call_operand.vmem [shape: bf16[64,1024], index: 2, kind: input, shape index: {}]
  %s3 = inlined_call_operand.vmem [shape: s32[1,1024], index: 3, kind: input, shape index: {}]
  %s4 = inlined_call_operand.vmem [shape: f32[8,1024], index: 4, kind: output, shape index: {}]
  %s5 = sld [smem:[#allocation0]]
  $region72: #{_retrieve.3} parent=0
    _
  %s7 = ssub.s32 1, %s5
  %s8 = scalar_select 0, %s7, %s5
  $region1: #{_retrieve.3} parent=0
    #allocation2 [shape = 'u8[131072]{0}', space=vmem, size = 0x20000, scoped, tag = 'input window, operand 2']
    loop: start=0, step=1, limit=4
    $region2: #{_retrieve.3} parent=1 // loop_pre_header
      _
    $region3: #{_retrieve.3} parent=1 // loop_header
      %s10 = sphi 0, %s14
      %p11 = scmp.ge.s32.totalorder %s10, 4
      %s18 = sphi 0, %s18
      %s20 = sphi 0, %s18
      %s21 = sphi 0, %s20
      %s35 = sphi 0, %s21
      %s39 = sphi 0, %s39
      %s41 = sphi 0, %s39
      %s42 = sphi 0, %s41
      %s56 = sphi 0, %s42
      %s62 = sphi 0, %s64
      %s65 = sphi 0, %s62
      %s66 = sphi 0, %s65
      %s82 = sphi 0, %s66
      %s88 = sphi 0, %s90
      %s91 = sphi 0, %s88
      %s92 = sphi 0, %s91
      %s108 = sphi 0, %s92
      %s114 = sphi 0, %s116
      %s117 = sphi 0, %s114
      %s118 = sphi 0, %s117
      %s134 = sphi 0, %s118
    $region4: #{_retrieve.3} parent=1 // loop_header_branch
      %13 = sbr.rel (%p11) target = $region8
    $region5: #{_retrieve.3} parent=1 // loop_body
      %s15 = ssub.s32 %s10, 1
      %s16 = ssub.s32 %s10, 2
      %s17 = sadd.s32 %s10, 1
      %s19 = sadd.s32 %s18, 1
      %p22 = scmp.eq.s32.totalorder %s10, 1
      %p23 = scmp.ne.s32.totalorder %s18, %s20
      %p24 = scmp.eq.s32.totalorder %s10, 0
      %p25 = por %p23, %p24
      %p26 = scmp.ne.s32.totalorder %s18, %s20
      %p27 = scmp.eq.s32.totalorder %s15, 1
      %p28 = por %p26, %p27
      %p29 = scmp.ne.s32.totalorder %s20, %s21
      %p30 = scmp.eq.s32.totalorder %s15, 0
      %p31 = por %p29, %p30
      %p32 = scmp.ne.s32.totalorder %s20, %s21
      %p33 = scmp.eq.s32.totalorder %s16, 1
      %p34 = por %p32, %p33
      %p36 = scmp.ne.s32.totalorder %s21, %s35
      %p37 = scmp.eq.s32.totalorder %s16, 0
      %p38 = por %p36, %p37
      %s40 = sadd.s32 %s39, 1
      %p43 = scmp.eq.s32.totalorder %s10, 1
      %p44 = scmp.ne.s32.totalorder %s39, %s41
      %p45 = scmp.eq.s32.totalorder %s10, 0
      %p46 = por %p44, %p45
      %p47 = scmp.ne.s32.totalorder %s39, %s41
      %p48 = scmp.eq.s32.totalorder %s15, 1
      %p49 = por %p47, %p48
      %p50 = scmp.ne.s32.totalorder %s41, %s42
      %p51 = scmp.eq.s32.totalorder %s15, 0
      %p52 = por %p50, %p51
      %p53 = scmp.ne.s32.totalorder %s41, %s42
      %p54 = scmp.eq.s32.totalorder %s16, 1
      %p55 = por %p53, %p54
      %p57 = scmp.ne.s32.totalorder %s42, %s56
      %p58 = scmp.eq.s32.totalorder %s16, 0
      %p59 = por %p57, %p58
      %s60 = ssub.s32 %s10, %s17
      %p61 = scmp.eq.s32.totalorder %s60, 0
      %s63 = sadd.s32 %s62, 1
      %s64 = scalar_select %p61, %s62, %s63
      %p67 = pneg %p61
      %p68 = scmp.eq.s32.totalorder %s10, 1
      %p69 = por %p67, %p68
      %p70 = scmp.ne.s32.totalorder %s62, %s65
      %p71 = scmp.eq.s32.totalorder %s10, 0
      %p72 = por %p70, %p71
      %p73 = scmp.ne.s32.totalorder %s62, %s65
      %p74 = scmp.eq.s32.totalorder %s15, 1
      %p75 = por %p73, %p74
      %p76 = scmp.ne.s32.totalorder %s65, %s66
      %p77 = scmp.eq.s32.totalorder %s15, 0
      %p78 = por %p76, %p77
      %p79 = scmp.ne.s32.totalorder %s65, %s66
      %p80 = scmp.eq.s32.totalorder %s16, 1
      %p81 = por %p79, %p80
      %p83 = scmp.ne.s32.totalorder %s66, %s82
      %p84 = scmp.eq.s32.totalorder %s16, 0
      %p85 = por %p83, %p84
      %s86 = ssub.s32 %s10, %s17
      %p87 = scmp.eq.s32.totalorder %s86, 0
      %s89 = sadd.s32 %s88, 1
      %s90 = scalar_select %p87, %s88, %s89
      %p93 = pneg %p87
      %p94 = scmp.eq.s32.totalorder %s10, 1
      %p95 = por %p93, %p94
      %p96 = scmp.ne.s32.totalorder %s88, %s91
      %p97 = scmp.eq.s32.totalorder %s10, 0
      %p98 = por %p96, %p97
      %p99 = scmp.ne.s32.totalorder %s88, %s91
      %p100 = scmp.eq.s32.totalorder %s15, 1
      %p101 = por %p99, %p100
      %p102 = scmp.ne.s32.totalorder %s91, %s92
      %p103 = scmp.eq.s32.totalorder %s15, 0
      %p104 = por %p102, %p103
      %p105 = scmp.ne.s32.totalorder %s91, %s92
      %p106 = scmp.eq.s32.totalorder %s16, 1
      %p107 = por %p105, %p106
      %p109 = scmp.ne.s32.totalorder %s92, %s108
      %p110 = scmp.eq.s32.totalorder %s16, 0
      %p111 = por %p109, %p110
      %s112 = ssub.s32 %s10, %s17
      %p113 = scmp.eq.s32.totalorder %s112, 0
      %s115 = sadd.s32 %s114, 1
      %s116 = scalar_select %p113, %s114, %s115
      %p119 = pneg %p113
      %p120 = scmp.eq.s32.totalorder %s10, 1
      %p121 = por %p119, %p120
      %p122 = scmp.ne.s32.totalorder %s114, %s117
      %p123 = scmp.eq.s32.totalorder %s10, 0
      %p124 = por %p122, %p123
      %p125 = scmp.ne.s32.totalorder %s114, %s117
      %p126 = scmp.eq.s32.totalorder %s15, 1
      %p127 = por %p125, %p126
      %p128 = scmp.ne.s32.totalorder %s117, %s118
      %p129 = scmp.eq.s32.totalorder %s15, 0
      %p130 = por %p128, %p129
      %p131 = scmp.ne.s32.totalorder %s117, %s118
      %p132 = scmp.eq.s32.totalorder %s16, 1
      %p133 = por %p131, %p132
      %p135 = scmp.ne.s32.totalorder %s118, %s134
      %p136 = scmp.eq.s32.totalorder %s16, 0
      %p137 = por %p135, %p136
      %p138 = scmp.le.s32.totalorder 1, %s10
      %p139 = scmp.lt.s32.totalorder %s10, 3
      %p140 = pnand %p138, %p139
      %p141 = pneg %p140
      // Predicated region
      $region9: #{_retrieve.3} parent=5 // pred_check
        _
      $region10: #{_retrieve.3} parent=5 // pred_check_branch
        %143 = sbr.rel (%p140) target = $region12
      $region11: #{_retrieve.3} parent=5 // pred_region
        %s144 = ssub.s32 %s10, 1
        // Predicated region
        $region13: #{_retrieve.3} parent=11 // pred_check
          %p145 = pneg %p31
        $region14: #{_retrieve.3} parent=11 // pred_check_branch
          %147 = sbr.rel (%p145) target = $region16
        $region15: #{_retrieve.3} parent=11 // pred_region
          _
        $region16: #{_retrieve.3} parent=11 // pred_fallthru
          _
        // Predicated region
        $region17: #{_retrieve.3} parent=11 // pred_check
          %p148 = pneg %p52
        $region18: #{_retrieve.3} parent=11 // pred_check_branch
          %150 = sbr.rel (%p148) target = $region20
        $region19: #{_retrieve.3} parent=11 // pred_region
          _
        $region20: #{_retrieve.3} parent=11 // pred_fallthru
          _
      $region12: #{_retrieve.3} parent=5 // pred_fallthru
        _
      %p151 = scmp.lt.s32.totalorder %s10, 2
      // Predicated region
      $region21: #{_retrieve.3} parent=5 // pred_check
        %p152 = pneg %p151
      $region22: #{_retrieve.3} parent=5 // pred_check_branch
        %154 = sbr.rel (%p152) target = $region24
      $region23: #{_retrieve.3} parent=5 // pred_region
        // Predicated region
        $region25: #{_retrieve.3} parent=23 // pred_check
          %p155 = pneg %p72
        $region26: #{_retrieve.3} parent=23 // pred_check_branch
          %157 = sbr.rel (%p155) target = $region28
        $region27: #{_retrieve.3} parent=23 // pred_region
          %s158 = sand.u32 %s62, 1
          %s159 = sand.u32 %s62, 1
          %s160 = smul.addr %s159, 128
          %s161 = scalar_lea.vmem [#allocation2], %s160
          %s162 = smul.u32 4, %s10
          %s163 = smul.addr %s162, 4
          %s164 = scalar_lea.vmem %s2, %s163
          // Predicated region
          $region29: #{_retrieve.3} parent=27 // pred_check
            _
          $region30: #{_retrieve.3} parent=27 // pred_check_branch
            %166 = sbr.rel (0) target = $region32
          $region31: #{_retrieve.3} parent=27 // pred_region
            // Predicated region
            $region33: #{_retrieve.3} parent=31 // pred_check
              _
            $region34: #{_retrieve.3} parent=31 // pred_check_branch
              %168 = sbr.rel (0) target = $region36
            $region35: #{_retrieve.3} parent=31 // pred_region
              loop: start=0, step=1, limit=1
              $region37: #{_retrieve.3} parent=35 // loop_pre_header
                _
              $region38: #{_retrieve.3} parent=35 // loop_header
                %s170 = sphi 0, %s174
                %p171 = scmp.ge.s32.totalorder %s170, 1
                %s175 = sphi %s164, %s164
                %s176 = sphi %s161, %s161
              $region39: #{_retrieve.3} parent=35 // loop_header_branch
                %173 = sbr.rel (%p171) target = $region43
              $region40: #{_retrieve.3} parent=35 // loop_body
                %v177 = vld [vmem:[%s175] sm:$0xff]
                %178 = vst [vmem:[%s176] sm:$0xff] %v177
                %v179 = vld [vmem:[%s175 + $0x8] sm:$0xff]
                %180 = vst [vmem:[%s176 + $0x8] sm:$0xff] %v179
                %v181 = vld [vmem:[%s175 + $0x20] sm:$0xff]
                %182 = vst [vmem:[%s176 + $0x10] sm:$0xff] %v181
                %v183 = vld [vmem:[%s175 + $0x28] sm:$0xff]
                %184 = vst [vmem:[%s176 + $0x18] sm:$0xff] %v183
                %v185 = vld [vmem:[%s175 + $0x40] sm:$0xff]
                %186 = vst [vmem:[%s176 + $0x20] sm:$0xff] %v185
                %v187 = vld [vmem:[%s175 + $0x48] sm:$0xff]
                %188 = vst [vmem:[%s176 + $0x28] sm:$0xff] %v187
                %v189 = vld [vmem:[%s175 + $0x60] sm:$0xff]
                %190 = vst [vmem:[%s176 + $0x30] sm:$0xff] %v189
                %v191 = vld [vmem:[%s175 + $0x68] sm:$0xff]
                %192 = vst [vmem:[%s176 + $0x38] sm:$0xff] %v191
                %v193 = vld [vmem:[%s175 + $0x80] sm:$0xff]
                %194 = vst [vmem:[%s176 + $0x40] sm:$0xff] %v193
                %v195 = vld [vmem:[%s175 + $0x88] sm:$0xff]
                %196 = vst [vmem:[%s176 + $0x48] sm:$0xff] %v195
                %v197 = vld [vmem:[%s175 + $0xa0] sm:$0xff]
                %198 = vst [vmem:[%s176 + $0x50] sm:$0xff] %v197
                %v199 = vld [vmem:[%s175 + $0xa8] sm:$0xff]
                %200 = vst [vmem:[%s176 + $0x58] sm:$0xff] %v199
                %v201 = vld [vmem:[%s175 + $0xc0] sm:$0xff]
                %202 = vst [vmem:[%s176 + $0x60] sm:$0xff] %v201
                %v203 = vld [vmem:[%s175 + $0xc8] sm:$0xff]
                %204 = vst [vmem:[%s176 + $0x68] sm:$0xff] %v203
                %v205 = vld [vmem:[%s175 + $0xe0] sm:$0xff]
                %206 = vst [vmem:[%s176 + $0x70] sm:$0xff] %v205
                %v207 = vld [vmem:[%s175 + $0xe8] sm:$0xff]
                %208 = vst [vmem:[%s176 + $0x78] sm:$0xff] %v207
              $region41: #{_retrieve.3} parent=35 // loop_footer
                %s174 = sadd.s32 1, %s170
              $region42: #{_retrieve.3} parent=35 // loop_footer_branch
                %169 = sbr.rel target = $region38
              $region43: #{_retrieve.3} parent=35 // loop_exit
                _
            $region36: #{_retrieve.3} parent=31 // pred_fallthru
              _
            // Predicated region
            $region44: #{_retrieve.3} parent=31 // pred_check
              _
            $region45: #{_retrieve.3} parent=31 // pred_check_branch
              %210 = sbr.rel target = $region47
            $region46: #{_retrieve.3} parent=31 // pred_region
              _
            $region47: #{_retrieve.3} parent=31 // pred_fallthru
              _
          $region32: #{_retrieve.3} parent=27 // pred_fallthru
            _
          %211 = vnop
        $region28: #{_retrieve.3} parent=23 // pred_fallthru
          _
        // Predicated region
        $region48: #{_retrieve.3} parent=23 // pred_check
          %p212 = pneg %p98
        $region49: #{_retrieve.3} parent=23 // pred_check_branch
          %214 = sbr.rel (%p212) target = $region51
        $region50: #{_retrieve.3} parent=23 // pred_region
          %s215 = smul.u32 4, %s10
          %p216 = scmp.lt.s32.totalorder %s215, 7
          %s217 = scalar_select %p216, %s215, 7
          %s218 = scalar_lea.vmem %s3, %s217
          %s219 = smul.u32 4, %s10
        $region51: #{_retrieve.3} parent=23 // pred_fallthru
          _
      $region24: #{_retrieve.3} parent=5 // pred_fallthru
        _
      %p220 = scmp.le.s32.totalorder 1, %s10
      %p221 = scmp.lt.s32.totalorder %s10, 3
      %p222 = pnand %p220, %p221
      %p223 = pneg %p222
      // Predicated region
      $region52: #{_retrieve.3} parent=5 // pred_check
        _
      $region53: #{_retrieve.3} parent=5 // pred_check_branch
        %225 = sbr.rel (%p222) target = $region55
      $region54: #{_retrieve.3} parent=5 // pred_region
        %s226 = ssub.s32 %s10, 1
        %s227 = sand.u32 %s65, 1
        %s228 = sand.u32 %s65, 1
        %s229 = smul.addr %s228, 128
        %s230 = scalar_lea.vmem [#allocation2], %s229
        // Predicated region
        $region56: #{_retrieve.3} parent=54 // pred_check
          %p231 = pneg %p78
        $region57: #{_retrieve.3} parent=54 // pred_check_branch
          %233 = sbr.rel (%p231) target = $region59
        $region58: #{_retrieve.3} parent=54 // pred_region
          _
        $region59: #{_retrieve.3} parent=54 // pred_fallthru
          _
        %p234 = pneg %p31
        %p235 = pneg %p28
        %p236 = pneg %p52
        %p237 = pneg %p49
        %s238 = sand.u32 %s65, 1
        %s239 = sand.u32 %s65, 1
        %s240 = smul.addr %s239, 128
        %s241 = scalar_lea.vmem [#allocation2], %s240
        %p242 = pneg %p78
        %p243 = pneg %p75
        %s244 = smul.u32 4, %s15
        %p245 = scmp.lt.s32.totalorder %s244, 7
        %s246 = scalar_select %p245, %s244, 7
        %s247 = scalar_lea.vmem %s3, %s246
        %p248 = pneg %p104
        %p249 = pneg %p101
        %p250 = pneg %p130
        %p251 = pneg %p127
        %s252 = smul.u32 4, %s15
        %p253 = scmp.lt.s32.totalorder %s252, 7
        %s254 = scalar_select %p253, %s252, 7
        %s255 = smul.addr %s254, 8
        %s256 = scalar_lea.vmem %s4, %s255
        %s257 = smul.u32 4, %s15
        %s258 = smul.u32 4, %s15
        %p259 = scmp.lt.s32.totalorder %s258, 7
        %s260 = scalar_select %p259, %s258, 7
        %s261 = scalar_lea.vmem %s3, %s260
        %s262 = smul.u32 4, %s15
        %s263 = smul.u32 4, %s15
        %p264 = scmp.lt.s32.totalorder %s263, 7
        %s265 = scalar_select %p264, %s263, 7
        %s266 = smul.addr %s265, 8
        %s267 = scalar_lea.vmem %s4, %s266
        %s268 = smul.u32 4, %s15
        %v270 = vld [vmem:[%s0] sm:$0xf]
        %v271 = vld [vmem:[%s230] sm:$0xff]
        %v272 = vld [vmem:[%s230 + $0x8] sm:$0xff]
        %v273 = vld [vmem:[%s230 + $0x10] sm:$0xff]
        %v274 = vld [vmem:[%s230 + $0x18] sm:$0xff]
        %v275 = vld [vmem:[%s230 + $0x20] sm:$0xff]
        %v276 = vld [vmem:[%s230 + $0x28] sm:$0xff]
        %v277 = vld [vmem:[%s230 + $0x30] sm:$0xff]
        %v278 = vld [vmem:[%s230 + $0x38] sm:$0xff]
        %v279 = vld [vmem:[%s230 + $0x40] sm:$0xff]
        %v280 = vld [vmem:[%s230 + $0x48] sm:$0xff]
        %v281 = vld [vmem:[%s230 + $0x50] sm:$0xff]
        %v282 = vld [vmem:[%s230 + $0x58] sm:$0xff]
        %v283 = vld [vmem:[%s230 + $0x60] sm:$0xff]
        %v284 = vld [vmem:[%s230 + $0x68] sm:$0xff]
        %v285 = vld [vmem:[%s230 + $0x70] sm:$0xff]
        %v286 = vld [vmem:[%s230 + $0x78] sm:$0xff]
        %v303 = vunpack.c.l.b16 %v271
        %v304 = vunpack.c.h.b16 %v271
        %v305 = vunpack.c.l.b16 %v272
        %v306 = vunpack.c.h.b16 %v272
        %v307 = vunpack.c.l.b16 %v273
        %v308 = vunpack.c.h.b16 %v273
        %v309 = vunpack.c.l.b16 %v274
        %v310 = vunpack.c.h.b16 %v274
        %v311 = vunpack.c.l.b16 %v275
        %v312 = vunpack.c.h.b16 %v275
        %v313 = vunpack.c.l.b16 %v276
        %v314 = vunpack.c.h.b16 %v276
        %v315 = vunpack.c.l.b16 %v277
        %v316 = vunpack.c.h.b16 %v277
        %v317 = vunpack.c.l.b16 %v278
        %v318 = vunpack.c.h.b16 %v278
        %v319 = vunpack.c.l.b16 %v279
        %v320 = vunpack.c.h.b16 %v279
        %v321 = vunpack.c.l.b16 %v280
        %v322 = vunpack.c.h.b16 %v280
        %v323 = vunpack.c.l.b16 %v281
        %v324 = vunpack.c.h.b16 %v281
        %v325 = vunpack.c.l.b16 %v282
        %v326 = vunpack.c.h.b16 %v282
        %v327 = vunpack.c.l.b16 %v283
        %v328 = vunpack.c.h.b16 %v283
        %v329 = vunpack.c.l.b16 %v284
        %v330 = vunpack.c.h.b16 %v284
        %v331 = vunpack.c.l.b16 %v285
        %v332 = vunpack.c.h.b16 %v285
        %v333 = vunpack.c.l.b16 %v286
        %v334 = vunpack.c.h.b16 %v286
        %v335 = vpack.c.b16 %v307, %v303
        %v336 = vpack.c.b16 %v308, %v304
        %v337 = vpack.c.b16 %v309, %v305
        %v338 = vpack.c.b16 %v310, %v306
        %v339 = vpack.c.b16 %v315, %v311
        %v340 = vpack.c.b16 %v316, %v312
        %v341 = vpack.c.b16 %v317, %v313
        %v342 = vpack.c.b16 %v318, %v314
        %v343 = vpack.c.b16 %v323, %v319
        %v344 = vpack.c.b16 %v324, %v320
        %v345 = vpack.c.b16 %v325, %v321
        %v346 = vpack.c.b16 %v326, %v322
        %v347 = vpack.c.b16 %v331, %v327
        %v348 = vpack.c.b16 %v332, %v328
        %v349 = vpack.c.b16 %v333, %v329
        %v350 = vpack.c.b16 %v334, %v330
        %vm367 = vcmask 523264
        %v369 = vsel %vm367, %v270, 0
        %371 = vmatpush.bf16.msra.mxu0 0
        %372 = vmatpush.bf16.msra.mxu0 0
        %373 = vmatpush.bf16.msra.mxu0 0
        %374 = vmatpush.bf16.msra.mxu0 0
        %375 = vmatpush.bf16.msra.mxu0 %v347
        %376 = vmatpush.bf16.msra.mxu0 %v343
        %377 = vmatpush.bf16.msra.mxu0 %v339
        %378 = vmatpush.bf16.msra.mxu0 %v335
        %379 = vmatmul.bf16.gmra.mxu0 %v369
        %v380 = vpop.f32.mrf.mxu0
        %v381 = vadd.f32 0.0, %v380
        %v382 = vpop.f32.mrf.mxu0
        %383 = vdwg.mxu0
        %384 = vmatpush.bf16.msra.mxu0 0
        %385 = vmatpush.bf16.msra.mxu0 0
        %386 = vmatpush.bf16.msra.mxu0 0
        %387 = vmatpush.bf16.msra.mxu0 0
        %388 = vmatpush.bf16.msra.mxu0 %v348
        %389 = vmatpush.bf16.msra.mxu0 %v344
        %390 = vmatpush.bf16.msra.mxu0 %v340
        %391 = vmatpush.bf16.msra.mxu0 %v336
        %392 = vmatmul.bf16.gmra.mxu0 %v369
        %v393 = vpop.f32.mrf.mxu0
        %v394 = vadd.f32 0.0, %v393
        %v395 = vpop.f32.mrf.mxu0
        %396 = vdwg.mxu0
        %397 = vmatpush.bf16.msra.mxu0 0
        %398 = vmatpush.bf16.msra.mxu0 0
        %399 = vmatpush.bf16.msra.mxu0 0
        %400 = vmatpush.bf16.msra.mxu0 0
        %401 = vmatpush.bf16.msra.mxu0 %v349
        %402 = vmatpush.bf16.msra.mxu0 %v345
        %403 = vmatpush.bf16.msra.mxu0 %v341
        %404 = vmatpush.bf16.msra.mxu0 %v337
        %405 = vmatmul.bf16.gmra.mxu0 %v369
        %v406 = vpop.f32.mrf.mxu0
        %v407 = vadd.f32 0.0, %v406
        %v408 = vpop.f32.mrf.mxu0
        %409 = vdwg.mxu0
        %410 = vmatpush.bf16.msra.mxu0 0
        %411 = vmatpush.bf16.msra.mxu0 0
        %412 = vmatpush.bf16.msra.mxu0 0
        %413 = vmatpush.bf16.msra.mxu0 0
        %414 = vmatpush.bf16.msra.mxu0 %v350
        %415 = vmatpush.bf16.msra.mxu0 %v346
        %416 = vmatpush.bf16.msra.mxu0 %v342
        %417 = vmatpush.bf16.msra.mxu0 %v338
        %418 = vmatmul.bf16.gmra.mxu0 %v369
        %v419 = vpop.f32.mrf.mxu0
        %v420 = vadd.f32 0.0, %v419
        %v421 = vpop.f32.mrf.mxu0
        %422 = vdwg.mxu0
        %v423 = vld [vmem:[%s1] sm:$0xff]
        %v424 = vld [vmem:[%s261] sm:$0xf]
        %425 = vset.pattern.permute.xlu0 0
        %426 = vperm.xlu0 %425, %v423
        %v427 = vpop.permute.xlu0 %426
        %v428 = vperm.slane %v424, 0
        %v429 = vperm.slane %v424, 1
        %v430 = vperm.slane %v424, 2
        %v431 = vperm.slane %v424, 3
        %vm432 = vcmp.eq.s32.totalorder %v427, %v428
        %vm433 = vcmp.eq.s32.totalorder %v427, %v429
        %vm434 = vcmp.eq.s32.totalorder %v427, %v430
        %vm435 = vcmp.eq.s32.totalorder %v427, %v431
        %v436 = vsel %vm432, %v381, -1e+09
        %v437 = vsel %vm433, %v394, -1e+09
        %v438 = vsel %vm434, %v407, -1e+09
        %v439 = vsel %vm435, %v420, -1e+09
        %440 = vst [vmem:[%s267] sm:$0xff] %v436
        %441 = vst [vmem:[%s267 + $0x8] sm:$0xff] %v437
        %442 = vst [vmem:[%s267 + $0x10] sm:$0xff] %v438
        %443 = vst [vmem:[%s267 + $0x18] sm:$0xff] %v439
        %s444 = smul.u32 4, %s15
        %p445 = scmp.lt.s32.totalorder %s444, 7
        %s446 = scalar_select %p445, %s444, 7
        %s447 = smul.addr %s446, 8
        %s448 = scalar_lea.vmem %s4, %s447
        // Predicated region
        $region60: #{_retrieve.3} parent=54 // pred_check
          %p449 = pneg %p127
        $region61: #{_retrieve.3} parent=54 // pred_check_branch
          %451 = sbr.rel (%p449) target = $region63
        $region62: #{_retrieve.3} parent=54 // pred_region
          %s452 = smul.u32 4, %s15
        $region63: #{_retrieve.3} parent=54 // pred_fallthru
          _
      $region55: #{_retrieve.3} parent=5 // pred_fallthru
        _
      %p453 = scmp.le.s32.totalorder 2, %s10
      // Predicated region
      $region64: #{_retrieve.3} parent=5 // pred_check
        %p454 = pneg %p453
      $region65: #{_retrieve.3} parent=5 // pred_check_branch
        %456 = sbr.rel (%p454) target = $region67
      $region66: #{_retrieve.3} parent=5 // pred_region
        %s457 = ssub.s32 %s10, 2
        // Predicated region
        $region68: #{_retrieve.3} parent=66 // pred_check
          %p458 = pneg %p133
        $region69: #{_retrieve.3} parent=66 // pred_check_branch
          %460 = sbr.rel (%p458) target = $region71
        $region70: #{_retrieve.3} parent=66 // pred_region
          %s461 = smul.u32 4, %s16
          %p462 = scmp.lt.s32.totalorder %s461, 7
          %s463 = scalar_select %p462, %s461, 7
          %s464 = smul.addr %s463, 8
          %s465 = scalar_lea.vmem %s4, %s464
        $region71: #{_retrieve.3} parent=66 // pred_fallthru
          _
      $region67: #{_retrieve.3} parent=5 // pred_fallthru
        _
    $region6: #{_retrieve.3} parent=1 // loop_footer
      %s14 = sadd.s32 1, %s10
    $region7: #{_retrieve.3} parent=1 // loop_footer_branch
      %9 = sbr.rel target = $region3
    $region8: #{_retrieve.3} parent=1 // loop_exit
      _

</llo_original>
